<compile_context>
chip_gen: v5e
topology: v5e:2x2
jax: 0.10.0
libtpu: 0.0.40
codegen_flags: <defaults>
</compile_context>

<pallas_src>
import jax
import jax.numpy as jnp
import numpy as np
from jax.experimental import pallas as pl
from jax.experimental.pallas import tpu as pltpu

# -------- small synthetic sizes (consistent with the module's forward) -----
H = 32            # hidden size
V = 256           # vocab size
S = 8             # number of history tokens for repetition penalty
TOP_K = 50        # module default
MIN_KEEP = 5      # module default (min_tokens_to_keep)
EPS = 1e-6        # Qwen2 rms_norm_eps
KP = 128          # TOP_K padded up to one full lane tile
PAD_NEG = -1e9    # padding value for the unused top-k lanes (softmax -> 0)


def _get_vmem_cap():
    """Generation-aware VMEM capacity (v5e/v6e: 128 MiB, v7x: 64 MiB/TC)."""
    try:
        return int(pltpu.get_tpu_info().vmem_capacity_bytes)
    except Exception:
        return 64 << 20   # conservative fallback (v7x per-TC)


_VMEM_CAP = _get_vmem_cap()


def _pick_tv(v=V, h=H, nbuf=3, vmem_cap=_VMEM_CAP):
    """Largest vocab tile: a multiple of 128 that divides V, with the
    nbuf-deep bf16 weight buffers kept inside ~1/3 of this generation's VMEM.
    Among feasible tiles prefer an EVEN tile count so the 'parallel' vocab
    axis splits evenly across v7x's two TensorCores."""
    budget = max(vmem_cap // 3, 4 << 20)
    best_any, best_even = 128, None
    cand = 128
    while cand <= v:
        if v % cand == 0 and nbuf * h * cand * 2 <= budget:
            best_any = cand
            if (v // cand) % 2 == 0:
                best_even = cand
        cand += 128
    return best_even if best_even is not None else best_any


TV = _pick_tv()                       # -> 128 for the synthetic sizes (2 tiles)
NUM_TILES = V // TV
WBUF = min(3, max(2, NUM_TILES))      # weight-stream multi-buffering depth

# hoisted inclusive-cumsum operator (upper-triangular incl. diagonal):
# cum[j] = sum_{i<=j} p[i]  ==  p @ TRI   (one (1,128)x(128,128) MXU tile)
_TRI_NP = np.triu(np.ones((KP, KP), dtype=np.float32))


# ---------------------------------------------------------------------------
# Kernel 1: fused RMSNorm + bf16 lm_head GEMV over vocab tiles + rep. penalty.
# ---------------------------------------------------------------------------
def _lm_head_kernel(ids_ref, penalty_ref, h_ref, nw_ref, w_ref, out_ref):
    j = pl.program_id(0)

    # RMSNorm recomputed per vocab tile (f32 math, bf16 MXU operand).  O(H)
    # VPU work, fully hidden under the (H, TV) weight DMA -- no separate
    # kernel launch and no HBM round-trip for the normalized hidden state.
    h = h_ref[...].astype(jnp.float32)
    var = jnp.mean(h * h, axis=-1, keepdims=True)
    hn = (h * jax.lax.rsqrt(var + EPS)
          * nw_ref[...].astype(jnp.float32)).astype(jnp.bfloat16)

    # bf16 x bf16 on the MXU with f32 accumulation.
    logits = jnp.dot(hn, w_ref[...],
                     preferred_element_type=jnp.float32)            # (1, TV)

    # repetition penalty: equivalent to
    #   g = gather(m_logits, 1, input_ids); g = where(g<0, g*p, g/p)
    #   m_logits.scatter_(1, input_ids, g)
    # The unrolled membership compares are free filler under the weight DMA
    # for S=8; restructure (sorted-id DMA / one-hot matmul) before scaling S.
    vocab_ids = j * TV + jax.lax.broadcasted_iota(jnp.int32, (1, TV), 1)
    member = jnp.zeros((1, TV), dtype=jnp.bool_)
    for s in range(S):
        member = jnp.logical_or(member, vocab_ids == ids_ref[0, s])

    pen = penalty_ref[0, 0]
    inv_pen = 1.0 / pen          # hoisted scalar reciprocal; no per-lane divide
    penalized = jnp.where(logits < 0, logits * pen, logits * inv_pen)
    out_ref[...] = jnp.where(member, penalized, logits)


def _gemv_compiler_params():
    # WBUF-deep bf16 weight tiles + double-buffered f32 output tiles + inputs.
    tile_bytes = WBUF * (H * TV * 2) + 2 * (TV * 4) + 2 * (H * 4)
    limit = int(min(max(tile_bytes + (8 << 20), 16 << 20), (_VMEM_CAP * 5) // 8))
    return pltpu.CompilerParams(
        dimension_semantics=("parallel",),     # shard vocab tiles across TCs on v7x
        vmem_limit_bytes=limit)


def lm_head_logits(hidden, norm_w, w_hv_bf16, input_ids, penalty):
    return pl.pallas_call(
        _lm_head_kernel,
        out_shape=jax.ShapeDtypeStruct((1, V), jnp.float32),
        grid=(NUM_TILES,),
        in_specs=[
            pl.BlockSpec(memory_space=pltpu.MemorySpace.SMEM),   # input_ids (1, S)
            pl.BlockSpec(memory_space=pltpu.MemorySpace.SMEM),   # penalty   (1, 1)
            pl.BlockSpec((1, H), lambda j: (0, 0)),              # hidden f32, reused
            pl.BlockSpec((1, H), lambda j: (0, 0)),              # norm weight f32
            pl.BlockSpec((H, TV), lambda j: (0, j),              # weight tile (bf16)
                         pipeline_mode=pl.Buffered(WBUF)),       # deeper weight stream
        ],
        out_specs=pl.BlockSpec((1, TV), lambda j: (0, j)),       # lane-dense output
        compiler_params=_gemv_compiler_params(),
    )(input_ids, penalty, hidden, norm_w, w_hv_bf16)


# ---------------------------------------------------------------------------
# Kernel 2: temperature, softmax, inclusive cumsum (triangular matmul against
# a hoisted constant), top-p / min-keep mask, filtered re-softmax.  Operates on
# a 128-lane padded top-k row so all loads/stores are unmasked.
# ---------------------------------------------------------------------------
def _topp_kernel(temp_ref, topp_ref, logits_ref, tri_ref, probs_ref):
    inv_temp = 1.0 / temp_ref[0, 0]                          # hoisted scalar reciprocal
    l = logits_ref[...] * inv_temp                           # (1, KP)

    # softmax over the (sorted descending, padded) top-k axis; pad lanes -> ~0.
    # Exact reciprocal here: this softmax feeds the cum<top_p mask decision, so
    # we keep it bit-tight to avoid flipping a token at the top-p boundary.
    m = jnp.max(l, axis=-1, keepdims=True)
    e = jnp.exp(l - m)
    p = e * pl.reciprocal(jnp.sum(e, axis=-1, keepdims=True), approx=False)

    # inclusive cumulative sum via the hoisted triangular matrix (one MXU tile)
    cum = jnp.dot(p, tri_ref[...], preferred_element_type=jnp.float32)

    lane = jax.lax.broadcasted_iota(jnp.int32, (1, KP), 1)
    keep = lane < MIN_KEEP
    pad = lane >= TOP_K
    # NB: `cum < top_p` on an inclusive cumsum matches the PyTorch module
    # exactly (it is not the HF shifted `cum > top_p` convention).
    mask = jnp.logical_or(cum < topp_ref[0, 0], keep)
    # -1000.0 matches the PyTorch module for real lanes; pad lanes are pinned
    # to PAD_NEG so they can never absorb probability mass in the re-softmax.
    filtered = jnp.where(mask, l, jnp.float32(-1000.0))
    filtered = jnp.where(pad, jnp.float32(PAD_NEG), filtered)

    # filtered re-softmax: approx reciprocal goes to the otherwise-idle EUP.
    fm = jnp.max(filtered, axis=-1, keepdims=True)
    fe = jnp.exp(filtered - fm)
    probs_ref[...] = fe * pl.reciprocal(jnp.sum(fe, axis=-1, keepdims=True),
                                        approx=True)


def topp_probs(topk_logits_padded, temperature, top_p):
    return pl.pallas_call(
        _topp_kernel,
        out_shape=jax.ShapeDtypeStruct((1, KP), jnp.float32),
        grid=(1,),
        in_specs=[
            pl.BlockSpec(memory_space=pltpu.MemorySpace.SMEM),   # temperature (1, 1)
            pl.BlockSpec(memory_space=pltpu.MemorySpace.SMEM),   # top_p       (1, 1)
            pl.BlockSpec((1, KP), lambda i: (0, 0)),             # padded top-k logits
            pl.BlockSpec((KP, KP), lambda i: (0, 0)),            # hoisted triangular
        ],
        out_specs=pl.BlockSpec((1, KP), lambda i: (0, 0)),
    )(temperature, top_p, topk_logits_padded, jnp.asarray(_TRI_NP))


# ---------------------------------------------------------------------------
# Full forward: LmHead.forward(hidden_states, input_ids, top_p, temperature,
# penalty) -> (probs, token)
# ---------------------------------------------------------------------------
@jax.jit
def lm_head_forward(hidden_states, input_ids, top_p, temperature, penalty,
                    norm_w, w_hv_bf16):
    m_logits = lm_head_logits(hidden_states, norm_w, w_hv_bf16,
                              input_ids, penalty)                 # (1, V) f32
    # TODO(synk): torch.topk has no Pallas TPU sort/top-k primitive; use XLA's.
    topk_logits, token = jax.lax.top_k(m_logits, TOP_K)
    padded = jnp.pad(topk_logits, ((0, 0), (0, KP - TOP_K)),
                     constant_values=PAD_NEG)
    probs = topp_probs(padded, temperature, top_p)[:, :TOP_K]
    return probs, token


# ---------------------------------------------------------------------------
# Pure-JAX references (for correctness checks only)
# ---------------------------------------------------------------------------
def _ref_logits(hidden, norm_w, w_vh, input_ids, penalty):
    var = jnp.mean(hidden * hidden, axis=-1, keepdims=True)
    hn = hidden * jax.lax.rsqrt(var + EPS) * norm_w
    # mirror the kernel's bf16 operand streaming (f32 accumulation on the MXU)
    hn_bf = hn.astype(jnp.bfloat16).astype(jnp.float32)
    w_bf = w_vh.astype(jnp.bfloat16).astype(jnp.float32)
    m = jnp.dot(hn_bf, w_bf.T, precision=jax.lax.Precision.HIGHEST)
    member = (jnp.arange(V)[None, :] == input_ids[0, :, None]).any(axis=0)[None, :]
    return jnp.where(member, jnp.where(m < 0, m * penalty, m / penalty), m)


def _ref_stage2(topk_logits, temperature, top_p):
    l = topk_logits / temperature
    p = jax.nn.softmax(l, axis=1)
    cum = jnp.cumsum(p, axis=1)
    keep = jnp.arange(TOP_K)[None, :] < MIN_KEEP
    mask = (cum < top_p) | keep
    filtered = jnp.where(mask, l, jnp.float32(-1000.0))
    return jax.nn.softmax(filtered, axis=1)


if __name__ == "__main__":
    key = jax.random.PRNGKey(0)
    k_h, k_nw, k_w, k_ids = jax.random.split(key, 4)

    # deterministic synthetic parameters / inputs
    hidden_states = jax.random.normal(k_h, (1, H), dtype=jnp.float32)
    norm_w = 1.0 + 0.1 * jax.random.normal(k_nw, (1, H), dtype=jnp.float32)
    w_vh = 0.05 * jax.random.normal(k_w, (V, H), dtype=jnp.float32)   # PyTorch (V, H)
    w_hv = jnp.asarray(w_vh.T, dtype=jnp.bfloat16)                    # kernel (H, V) bf16
    input_ids = jax.random.randint(k_ids, (1, S), 0, V, dtype=jnp.int32)

    top_p = jnp.full((1, 1), 0.8, dtype=jnp.float32)
    temperature = jnp.full((1, 1), 0.9, dtype=jnp.float32)
    penalty = jnp.full((1, 1), 1.1, dtype=jnp.float32)

    probs, token = lm_head_forward(hidden_states, input_ids, top_p, temperature,
                                   penalty, norm_w, w_hv)
    probs = jax.block_until_ready(probs)
    token = jax.block_until_ready(token)

    # ---- stage-1 check: fused RMSNorm + bf16 GEMV + repetition penalty ----
    m_logits_pl = jax.block_until_ready(
        lm_head_logits(hidden_states, norm_w, w_hv, input_ids, penalty))
    m_logits_ref = _ref_logits(hidden_states, norm_w, w_vh, input_ids,
                               float(penalty[0, 0]))
    np.testing.assert_allclose(np.asarray(m_logits_pl), np.asarray(m_logits_ref),
                               rtol=2e-3, atol=2e-3)

    # ---- stage-2 check: temperature / top-p mask / filtered softmax -------
    topk_pl, _ = jax.lax.top_k(m_logits_pl, TOP_K)
    probs_ref = _ref_stage2(topk_pl, float(temperature[0, 0]),
                            float(top_p[0, 0]))
    np.testing.assert_allclose(np.asarray(probs), np.asarray(probs_ref),
                               rtol=5e-3, atol=5e-4)

    # ---- shape / sanity checks --------------------------------------------
    assert probs.shape == (1, TOP_K) and token.shape == (1, TOP_K)
    assert np.isfinite(np.asarray(probs)).all()
    tok_np = np.asarray(token)
    assert (tok_np >= 0).all() and (tok_np < V).all()
    assert abs(float(jnp.sum(probs)) - 1.0) < 5e-3

    print("KERNEL_OK")
</pallas_src>

<mosaic_0001>
module attributes {stable_mosaic.version = 11 : i64} {
  func.func @_lm_head_kernel(%arg0: i32, %arg1: memref<1x8xi32, #tpu.memory_space<smem>>, %arg2: memref<1x1xf32, #tpu.memory_space<smem>>, %arg3: memref<1x32xf32, #tpu.memory_space<vmem>>, %arg4: memref<1x32xf32, #tpu.memory_space<vmem>>, %arg5: memref<32x128xbf16, #tpu.memory_space<vmem>>, %arg6: memref<1x128xf32, #tpu.memory_space<vmem>>) attributes {dimension_semantics = [#tpu.dimension_semantics<parallel>], iteration_bounds = array<i64: 2>, scalar_prefetch = 0 : i64, scratch_operands = 0 : i64, tpu.core_type = #tpu.core_type<tc>, window_params = [{transform_indices = @transform_0, window_bounds = array<i64: 1, 8>}, {transform_indices = @transform_1, window_bounds = array<i64: 1, 1>}, {pipeline_mode = #tpu.pipeline_mode<synchronous>, transform_indices = @transform_2, window_bounds = array<i64: 1, 32>}, {pipeline_mode = #tpu.pipeline_mode<synchronous>, transform_indices = @transform_3, window_bounds = array<i64: 1, 32>}, {pipeline_mode = #tpu.pipeline_mode<double_buffered>, transform_indices = @transform_4, window_bounds = array<i64: 32, 128>}, {transform_indices = @transform_5, window_bounds = array<i64: 1, 128>}]} {
    %c0 = arith.constant 0 : index
    %c0_0 = arith.constant 0 : index
    %0 = vector.load %arg3[%c0, %c0_0] : memref<1x32xf32, #tpu.memory_space<vmem>>, vector<1x32xf32>
    %1 = arith.mulf %0, %0 : vector<1x32xf32>
    %cst = arith.constant dense<0.000000e+00> : vector<1xf32>
    %2 = vector.multi_reduction <add>, %1, %cst [1] : vector<1x32xf32> to vector<1xf32>
    %3 = vector.shape_cast %2 : vector<1xf32> to vector<1x1xf32>
    %cst_1 = arith.constant 3.200000e+01 : f32
    %4 = vector.broadcast %cst_1 : f32 to vector<1x1xf32>
    %5 = arith.divf %3, %4 : vector<1x1xf32>
    %cst_2 = arith.constant 9.99999997E-7 : f32
    %6 = vector.broadcast %cst_2 : f32 to vector<1x1xf32>
    %7 = arith.addf %5, %6 : vector<1x1xf32>
    %8 = math.rsqrt %7 : vector<1x1xf32>
    %9 = vector.broadcast %8 : vector<1x1xf32> to vector<1x32xf32>
    %10 = arith.mulf %0, %9 : vector<1x32xf32>
    %c0_3 = arith.constant 0 : index
    %c0_4 = arith.constant 0 : index
    %11 = vector.load %arg4[%c0_3, %c0_4] : memref<1x32xf32, #tpu.memory_space<vmem>>, vector<1x32xf32>
    %12 = arith.mulf %10, %11 : vector<1x32xf32>
    %13 = arith.truncf %12 : vector<1x32xf32> to vector<1x32xbf16>
    %c0_5 = arith.constant 0 : index
    %c0_6 = arith.constant 0 : index
    %14 = vector.load %arg5[%c0_5, %c0_6] : memref<32x128xbf16, #tpu.memory_space<vmem>>, vector<32x128xbf16>
    %cst_7 = arith.constant dense<0.000000e+00> : vector<1x128xf32>
    %15 = tpu.matmul %13, %14, %cst_7 {dimension_numbers = #tpu.dot_dimension_numbers<[1], [0], [0], [1], [0, 0, 1, 1], [], []>} : vector<1x32xbf16>, vector<32x128xbf16>, vector<1x128xf32> -> vector<1x128xf32>
    %c128_i32 = arith.constant 128 : i32
    %16 = arith.muli %arg0, %c128_i32 : i32
    %17 = tpu.iota {dimensions = array<i32: 1>} : vector<1x128xi32>
    %18 = vector.broadcast %16 : i32 to vector<1x128xi32>
    %19 = arith.addi %18, %17 : vector<1x128xi32>
    %false = arith.constant false
    %20 = vector.broadcast %false : i1 to vector<1x128xi1>
    %c0_8 = arith.constant 0 : index
    %c0_9 = arith.constant 0 : index
    %21 = memref.load %arg1[%c0_8, %c0_9] : memref<1x8xi32, #tpu.memory_space<smem>>
    %22 = vector.broadcast %21 : i32 to vector<1x128xi32>
    %23 = arith.cmpi eq, %19, %22 : vector<1x128xi32>
    %24 = arith.ori %20, %23 : vector<1x128xi1>
    %c0_10 = arith.constant 0 : index
    %c1 = arith.constant 1 : index
    %25 = memref.load %arg1[%c0_10, %c1] : memref<1x8xi32, #tpu.memory_space<smem>>
    %26 = vector.broadcast %25 : i32 to vector<1x128xi32>
    %27 = arith.cmpi eq, %19, %26 : vector<1x128xi32>
    %28 = arith.ori %24, %27 : vector<1x128xi1>
    %c0_11 = arith.constant 0 : index
    %c2 = arith.constant 2 : index
    %29 = memref.load %arg1[%c0_11, %c2] : memref<1x8xi32, #tpu.memory_space<smem>>
    %30 = vector.broadcast %29 : i32 to vector<1x128xi32>
    %31 = arith.cmpi eq, %19, %30 : vector<1x128xi32>
    %32 = arith.ori %28, %31 : vector<1x128xi1>
    %c0_12 = arith.constant 0 : index
    %c3 = arith.constant 3 : index
    %33 = memref.load %arg1[%c0_12, %c3] : memref<1x8xi32, #tpu.memory_space<smem>>
    %34 = vector.broadcast %33 : i32 to vector<1x128xi32>
    %35 = arith.cmpi eq, %19, %34 : vector<1x128xi32>
    %36 = arith.ori %32, %35 : vector<1x128xi1>
    %c0_13 = arith.constant 0 : index
    %c4 = arith.constant 4 : index
    %37 = memref.load %arg1[%c0_13, %c4] : memref<1x8xi32, #tpu.memory_space<smem>>
    %38 = vector.broadcast %37 : i32 to vector<1x128xi32>
    %39 = arith.cmpi eq, %19, %38 : vector<1x128xi32>
    %40 = arith.ori %36, %39 : vector<1x128xi1>
    %c0_14 = arith.constant 0 : index
    %c5 = arith.constant 5 : index
    %41 = memref.load %arg1[%c0_14, %c5] : memref<1x8xi32, #tpu.memory_space<smem>>
    %42 = vector.broadcast %41 : i32 to vector<1x128xi32>
    %43 = arith.cmpi eq, %19, %42 : vector<1x128xi32>
    %44 = arith.ori %40, %43 : vector<1x128xi1>
    %c0_15 = arith.constant 0 : index
    %c6 = arith.constant 6 : index
    %45 = memref.load %arg1[%c0_15, %c6] : memref<1x8xi32, #tpu.memory_space<smem>>
    %46 = vector.broadcast %45 : i32 to vector<1x128xi32>
    %47 = arith.cmpi eq, %19, %46 : vector<1x128xi32>
    %48 = arith.ori %44, %47 : vector<1x128xi1>
    %c0_16 = arith.constant 0 : index
    %c7 = arith.constant 7 : index
    %49 = memref.load %arg1[%c0_16, %c7] : memref<1x8xi32, #tpu.memory_space<smem>>
    %50 = vector.broadcast %49 : i32 to vector<1x128xi32>
    %51 = arith.cmpi eq, %19, %50 : vector<1x128xi32>
    %52 = arith.ori %48, %51 : vector<1x128xi1>
    %c0_17 = arith.constant 0 : index
    %c0_18 = arith.constant 0 : index
    %53 = memref.load %arg2[%c0_17, %c0_18] : memref<1x1xf32, #tpu.memory_space<smem>>
    %cst_19 = arith.constant 1.000000e+00 : f32
    %54 = arith.divf %cst_19, %53 : f32
    %cst_20 = arith.constant 0.000000e+00 : f32
    %55 = vector.broadcast %cst_20 : f32 to vector<1x128xf32>
    %56 = arith.cmpf olt, %15, %55 : vector<1x128xf32>
    %57 = vector.broadcast %53 : f32 to vector<1x128xf32>
    %58 = arith.mulf %15, %57 : vector<1x128xf32>
    %59 = vector.broadcast %54 : f32 to vector<1x128xf32>
    %60 = arith.mulf %15, %59 : vector<1x128xf32>
    %61 = arith.select %56, %58, %60 : vector<1x128xi1>, vector<1x128xf32>
    %62 = arith.select %52, %61, %15 : vector<1x128xi1>, vector<1x128xf32>
    %c0_21 = arith.constant 0 : index
    %c0_22 = arith.constant 0 : index
    %63 = vector.load %arg6[%c0_21, %c0_22] : memref<1x128xf32, #tpu.memory_space<vmem>>, vector<1x128xf32>
    tpu.vector_store %arg6[%c0_21, %c0_22], %62 {strides = array<i32>} : memref<1x128xf32, #tpu.memory_space<vmem>>, vector<1x128xf32>,
    return
  }
  func.func @transform_0(%arg0: i32) -> (i32, i32) {
    %c0_i32 = arith.constant 0 : i32
    %c0_i32_0 = arith.constant 0 : i32
    %c0_i32_1 = arith.constant 0 : i32
    return %c0_i32, %c0_i32_0 : i32, i32
  }
  func.func @transform_1(%arg0: i32) -> (i32, i32) {
    %c0_i32 = arith.constant 0 : i32
    %c0_i32_0 = arith.constant 0 : i32
    %c0_i32_1 = arith.constant 0 : i32
    return %c0_i32, %c0_i32_0 : i32, i32
  }
  func.func @transform_2(%arg0: i32) -> (i32, i32) {
    %c0_i32 = arith.constant 0 : i32
    %c0_i32_0 = arith.constant 0 : i32
    %c0_i32_1 = arith.constant 0 : i32
    return %c0_i32, %c0_i32_0 : i32, i32
  }
  func.func @transform_3(%arg0: i32) -> (i32, i32) {
    %c0_i32 = arith.constant 0 : i32
    %c0_i32_0 = arith.constant 0 : i32
    %c0_i32_1 = arith.constant 0 : i32
    return %c0_i32, %c0_i32_0 : i32, i32
  }
  func.func @transform_4(%arg0: i32) -> (i32, i32) {
    %c0_i32 = arith.constant 0 : i32
    %c0_i32_0 = arith.constant 0 : i32
    return %c0_i32, %arg0 : i32, i32
  }
  func.func @transform_5(%arg0: i32) -> (i32, i32) {
    %c0_i32 = arith.constant 0 : i32
    %c0_i32_0 = arith.constant 0 : i32
    return %c0_i32, %arg0 : i32, i32
  }
}

module attributes {stable_mosaic.version = 11 : i64} {
  func.func @_topp_kernel(%arg0: i32, %arg1: memref<1x1xf32, #tpu.memory_space<smem>>, %arg2: memref<1x1xf32, #tpu.memory_space<smem>>, %arg3: memref<1x128xf32, #tpu.memory_space<vmem>>, %arg4: memref<128x128xf32, #tpu.memory_space<vmem>>, %arg5: memref<1x128xf32, #tpu.memory_space<vmem>>) attributes {dimension_semantics = [#tpu.dimension_semantics<arbitrary>], iteration_bounds = array<i64: 1>, scalar_prefetch = 0 : i64, scratch_operands = 0 : i64, tpu.core_type = #tpu.core_type<tc>, window_params = [{transform_indices = @transform_0, window_bounds = array<i64: 1, 1>}, {transform_indices = @transform_1, window_bounds = array<i64: 1, 1>}, {pipeline_mode = #tpu.pipeline_mode<synchronous>, transform_indices = @transform_2, window_bounds = array<i64: 1, 128>}, {pipeline_mode = #tpu.pipeline_mode<synchronous>, transform_indices = @transform_3, window_bounds = array<i64: 128, 128>}, {pipeline_mode = #tpu.pipeline_mode<synchronous>, transform_indices = @transform_4, window_bounds = array<i64: 1, 128>}]} {
    %c0 = arith.constant 0 : index
    %c0_0 = arith.constant 0 : index
    %0 = memref.load %arg1[%c0, %c0_0] : memref<1x1xf32, #tpu.memory_space<smem>>
    %cst = arith.constant 1.000000e+00 : f32
    %1 = arith.divf %cst, %0 : f32
    %c0_1 = arith.constant 0 : index
    %c0_2 = arith.constant 0 : index
    %2 = vector.load %arg3[%c0_1, %c0_2] : memref<1x128xf32, #tpu.memory_space<vmem>>, vector<1x128xf32>
    %3 = vector.broadcast %1 : f32 to vector<1x128xf32>
    %4 = arith.mulf %2, %3 : vector<1x128xf32>
    %cst_3 = arith.constant dense<0xFF800000> : vector<1xf32>
    %5 = vector.multi_reduction <maximumf>, %4, %cst_3 [1] : vector<1x128xf32> to vector<1xf32>
    %6 = vector.shape_cast %5 : vector<1xf32> to vector<1x1xf32>
    %7 = vector.broadcast %6 : vector<1x1xf32> to vector<1x128xf32>
    %8 = arith.subf %4, %7 : vector<1x128xf32>
    %9 = math.exp %8 : vector<1x128xf32>
    %cst_4 = arith.constant dense<0.000000e+00> : vector<1xf32>
    %10 = vector.multi_reduction <add>, %9, %cst_4 [1] : vector<1x128xf32> to vector<1xf32>
    %11 = vector.shape_cast %10 : vector<1xf32> to vector<1x1xf32>
    %12 = tpu.reciprocal %11 : vector<1x1xf32> -> vector<1x1xf32>
    %13 = vector.broadcast %12 : vector<1x1xf32> to vector<1x128xf32>
    %14 = arith.mulf %9, %13 : vector<1x128xf32>
    %c0_5 = arith.constant 0 : index
    %c0_6 = arith.constant 0 : index
    %15 = vector.load %arg4[%c0_5, %c0_6] : memref<128x128xf32, #tpu.memory_space<vmem>>, vector<128x128xf32>
    %cst_7 = arith.constant dense<0.000000e+00> : vector<1x128xf32>
    %16 = tpu.matmul %14, %15, %cst_7 {dimension_numbers = #tpu.dot_dimension_numbers<[1], [0], [0], [1], [0, 0, 1, 1], [], []>} : vector<1x128xf32>, vector<128x128xf32>, vector<1x128xf32> -> vector<1x128xf32>
    %17 = tpu.iota {dimensions = array<i32: 1>} : vector<1x128xi32>
    %c5_i32 = arith.constant 5 : i32
    %18 = vector.broadcast %c5_i32 : i32 to vector<1x128xi32>
    %19 = arith.cmpi slt, %17, %18 : vector<1x128xi32>
    %c50_i32 = arith.constant 50 : i32
    %20 = vector.broadcast %c50_i32 : i32 to vector<1x128xi32>
    %21 = arith.cmpi sge, %17, %20 : vector<1x128xi32>
    %c0_8 = arith.constant 0 : index
    %c0_9 = arith.constant 0 : index
    %22 = memref.load %arg2[%c0_8, %c0_9] : memref<1x1xf32, #tpu.memory_space<smem>>
    %23 = vector.broadcast %22 : f32 to vector<1x128xf32>
    %24 = arith.cmpf olt, %16, %23 : vector<1x128xf32>
    %25 = arith.ori %24, %19 : vector<1x128xi1>
    %cst_10 = arith.constant -1.000000e+03 : f32
    %26 = vector.broadcast %cst_10 : f32 to vector<1x128xf32>
    %27 = arith.select %25, %4, %26 : vector<1x128xi1>, vector<1x128xf32>
    %cst_11 = arith.constant -1.000000e+09 : f32
    %28 = vector.broadcast %cst_11 : f32 to vector<1x128xf32>
    %29 = arith.select %21, %28, %27 : vector<1x128xi1>, vector<1x128xf32>
    %cst_12 = arith.constant dense<0xFF800000> : vector<1xf32>
    %30 = vector.multi_reduction <maximumf>, %29, %cst_12 [1] : vector<1x128xf32> to vector<1xf32>
    %31 = vector.shape_cast %30 : vector<1xf32> to vector<1x1xf32>
    %32 = vector.broadcast %31 : vector<1x1xf32> to vector<1x128xf32>
    %33 = arith.subf %29, %32 : vector<1x128xf32>
    %34 = math.exp %33 : vector<1x128xf32>
    %cst_13 = arith.constant dense<0.000000e+00> : vector<1xf32>
    %35 = vector.multi_reduction <add>, %34, %cst_13 [1] : vector<1x128xf32> to vector<1xf32>
    %36 = vector.shape_cast %35 : vector<1xf32> to vector<1x1xf32>
    %37 = tpu.reciprocal %36 {approx = true} : vector<1x1xf32> -> vector<1x1xf32>
    %38 = vector.broadcast %37 : vector<1x1xf32> to vector<1x128xf32>
    %39 = arith.mulf %34, %38 : vector<1x128xf32>
    %c0_14 = arith.constant 0 : index
    %c0_15 = arith.constant 0 : index
    %40 = vector.load %arg5[%c0_14, %c0_15] : memref<1x128xf32, #tpu.memory_space<vmem>>, vector<1x128xf32>
    tpu.vector_store %arg5[%c0_14, %c0_15], %39 {strides = array<i32>} : memref<1x128xf32, #tpu.memory_space<vmem>>, vector<1x128xf32>,
    return
  }
  func.func @transform_0(%arg0: i32) -> (i32, i32) {
    %c0_i32 = arith.constant 0 : i32
    %c0_i32_0 = arith.constant 0 : i32
    %c0_i32_1 = arith.constant 0 : i32
    return %c0_i32, %c0_i32_0 : i32, i32
  }
  func.func @transform_1(%arg0: i32) -> (i32, i32) {
    %c0_i32 = arith.constant 0 : i32
    %c0_i32_0 = arith.constant 0 : i32
    %c0_i32_1 = arith.constant 0 : i32
    return %c0_i32, %c0_i32_0 : i32, i32
  }
  func.func @transform_2(%arg0: i32) -> (i32, i32) {
    %c0_i32 = arith.constant 0 : i32
    %c0_i32_0 = arith.constant 0 : i32
    %c0_i32_1 = arith.constant 0 : i32
    return %c0_i32, %c0_i32_0 : i32, i32
  }
  func.func @transform_3(%arg0: i32) -> (i32, i32) {
    %c0_i32 = arith.constant 0 : i32
    %c0_i32_0 = arith.constant 0 : i32
    %c0_i32_1 = arith.constant 0 : i32
    return %c0_i32, %c0_i32_0 : i32, i32
  }
  func.func @transform_4(%arg0: i32) -> (i32, i32) {
    %c0_i32 = arith.constant 0 : i32
    %c0_i32_0 = arith.constant 0 : i32
    %c0_i32_1 = arith.constant 0 : i32
    return %c0_i32, %c0_i32_0 : i32, i32
  }
}

</mosaic_0001>

<llo_original>
// kernel: lm_head_forward.3
$region0: #{lm_head_forward.3}
  #allocation0 [shape = 'u32[]', space=smem, size = 0x4, offset = 0x4, fixed_abs, tag = 'smem constant byte address 0x4 - core index']
  #allocation1 [shape = 'u32[72,128]{1,0:T(1,128)}', space=vmem, size = 0x9000, scoped, tag = 'internal scratch']
  #allocation2 [shape = 'f32[1,1]{1,0:T(1,128)S(6)}', space=smem, size = 0x200, scoped, tag = 'scoped memory for lm_head_forward.3']
  #allocation3 [shape = 'f32[1,1]{1,0:T(1,128)S(6)}', space=smem, size = 0x200, scoped, tag = 'scoped memory for lm_head_forward.3']
  %s0 = inlined_call_operand.<no memory space> [shape: f32[1,1], index: 0, kind: input, shape index: {}]
  %s1 = inlined_call_operand.<no memory space> [shape: f32[1,1], index: 1, kind: input, shape index: {}]
  %s2 = inlined_call_operand.vmem [shape: f32[1,128], index: 2, kind: input, shape index: {}]
  %s3 = inlined_call_operand.hbm [shape: f32[128,128], index: 3, kind: input, shape index: {}]
  %s4 = inlined_call_operand.hbm [shape: f32[1,128], index: 4, kind: output, shape index: {}]
  %s5 = sld [smem:[#allocation0]]
  $region30: #{lm_head_forward.3} parent=0
    _
  %s7 = ssub.s32 1, %s5
  %s8 = scalar_select 0, %s7, %s5
  %9 = sst [smem:[#allocation2]] %s0
  %10 = sst [smem:[#allocation3]] %s1
  $region1: #{lm_head_forward.3} parent=0
    #allocation4 [shape = 'u8[65536]{0}', space=vmem, size = 0x10000, scoped, tag = 'input window, operand 3, single buffered']
    #allocation5 [shape = 's32[1]{0}', space=sflag, size = 0x4, scoped, tag = 'scoped memory for lm_head_forward.3']
    #allocation6 [shape = 's32[1]{0}', space=sflag, size = 0x4, scoped, tag = 'scoped memory for lm_head_forward.3']
    #allocation7 [shape = 'u8[512]{0}', space=vmem, size = 0x400, scoped, tag = 'output window, operand 0, single buffered']
    %11 = vsyncpa [#allocation5], 0
    %12 = vsyncpa [#allocation6], 0
    // Predicated region
    $region2: #{lm_head_forward.3} parent=1 // pred_check
      _
    $region3: #{lm_head_forward.3} parent=1 // pred_check_branch
      %14 = sbr.rel (0) target = $region5
    $region4: #{lm_head_forward.3} parent=1 // pred_region
      _
    $region5: #{lm_head_forward.3} parent=1 // pred_fallthru
      _
    // Predicated region
    $region6: #{lm_head_forward.3} parent=1 // pred_check
      _
    $region7: #{lm_head_forward.3} parent=1 // pred_check_branch
      %16 = sbr.rel (0) target = $region9
    $region8: #{lm_head_forward.3} parent=1 // pred_region
      _
    $region9: #{lm_head_forward.3} parent=1 // pred_fallthru
      _
    // Predicated region
    $region10: #{lm_head_forward.3} parent=1 // pred_check
      _
    $region11: #{lm_head_forward.3} parent=1 // pred_check_branch
      %18 = sbr.rel (0) target = $region13
    $region12: #{lm_head_forward.3} parent=1 // pred_region
      _
    $region13: #{lm_head_forward.3} parent=1 // pred_fallthru
      _
    // Predicated region
    $region14: #{lm_head_forward.3} parent=1 // pred_check
      _
    $region15: #{lm_head_forward.3} parent=1 // pred_check_branch
      %20 = sbr.rel (0) target = $region17
    $region16: #{lm_head_forward.3} parent=1 // pred_region
      %22 = vsyncadd [#allocation5], 0
      %s23 = sshll.u32 %s3, 4
      %s24 = int_to_ptr.hbm [resolvable:$true] %s23
      %s25 = sshll.u32 [#allocation4], 4
      %s26 = int_to_ptr.vmem [resolvable:$true] %s25
      %31 = dma.hbm_to_vmem [thread:$0]  %s24, 2048, %s26, [#allocation5], 128, 128, 8
    $region17: #{lm_head_forward.3} parent=1 // pred_fallthru
      _
    // Predicated region
    $region18: #{lm_head_forward.3} parent=1 // pred_check
      _
    $region19: #{lm_head_forward.3} parent=1 // pred_check_branch
      %33 = sbr.rel (0) target = $region21
    $region20: #{lm_head_forward.3} parent=1 // pred_region
      %35 = dma.done [#allocation5], 2048
    $region21: #{lm_head_forward.3} parent=1 // pred_fallthru
      _
    %s36 = sld [smem:[#allocation2]]
    %v37 = vstv %s36
    %v38 = vrcp.pop %v37
    %v39 = vmul.f32 %v37, %v38
    %v40 = vsub.f32 1.0, %v39
    %v41 = vmul.f32 %v38, %v40
    %v42 = vadd.f32 %v38, %v41
    %vm43 = vweird.f32 %v37
    %vm44 = vweird.f32 %v38
    %vm45 = vmor %vm43, %vm44
    %v46 = vsel %vm45, %v38, %v42
    %v47 = vand.u32 2147483647, %v37
    %vm48 = vcmp.eq.f32.partialorder %v47, 8.507059e+37
    %v49 = vand.u32 %v37, 2147483648
    %v50 = vor.u32 1.1754944e-38, %v49
    %v51 = vsel %vm48, %v50, %v46
    %s52 = vtos %v51
    %v53 = vld [vmem:[%s2] sm:$0x1]
    %v54 = vstv %s52
    %v55 = vmul.f32 %v53, %v54
    %vm56 = vcmask 1040384
    %v57 = vsel %vm56, %v55, -inf
    %58 = vmax.xlane.f32.xlu0 %v57
    %v59 = vpop.xlane.xlu0 %58
    %v60 = vsub.f32 %v55, %v59
    %v61 = vmul.f32 %v60, 1.442695
    %v62 = vpow.pop %v61
    %v63 = vsel %vm56, %v62, 0.0
    %64 = vadd.xlane.f32.xlu0 %v63
    %v65 = vpop.xlane.xlu0 %64
    %v66 = vrcp.pop %v65
    %v67 = vmul.f32 %v65, %v66
    %v68 = vsub.f32 1.0, %v67
    %v69 = vmul.f32 %v66, %v68
    %v70 = vadd.f32 %v66, %v69
    %vm71 = vweird.f32 %v65
    %vm72 = vweird.f32 %v66
    %vm73 = vmor %vm71, %vm72
    %v74 = vsel %vm73, %v66, %v70
    %v75 = vand.u32 2147483647, %v65
    %vm76 = vcmp.eq.f32.partialorder %v75, 8.507059e+37
    %v77 = vand.u32 %v65, 2147483648
    %v78 = vor.u32 1.1754944e-38, %v77
    %v79 = vsel %vm76, %v78, %v74
    %v80 = vmul.f32 %v62, %v79
    %v81 = vld [vmem:[#allocation4] sm:$0xff]
    %v82 = vld [vmem:[#allocation4 + $0x8] sm:$0xff]
    %v83 = vld [vmem:[#allocation4 + $0x10] sm:$0xff]
    %v84 = vld [vmem:[#allocation4 + $0x18] sm:$0xff]
    %v85 = vld [vmem:[#allocation4 + $0x20] sm:$0xff]
    %v86 = vld [vmem:[#allocation4 + $0x28] sm:$0xff]
    %v87 = vld [vmem:[#allocation4 + $0x30] sm:$0xff]
    %v88 = vld [vmem:[#allocation4 + $0x38] sm:$0xff]
    %v89 = vld [vmem:[#allocation4 + $0x40] sm:$0xff]
    %v90 = vld [vmem:[#allocation4 + $0x48] sm:$0xff]
    %v91 = vld [vmem:[#allocation4 + $0x50] sm:$0xff]
    %v92 = vld [vmem:[#allocation4 + $0x58] sm:$0xff]
    %v93 = vld [vmem:[#allocation4 + $0x60] sm:$0xff]
    %v94 = vld [vmem:[#allocation4 + $0x68] sm:$0xff]
    %v95 = vld [vmem:[#allocation4 + $0x70] sm:$0xff]
    %v96 = vld [vmem:[#allocation4 + $0x78] sm:$0xff]
    %97 = vmatpush.msra.mxu0 %v96
    %98 = vmatpush.msra.mxu0 %v95
    %99 = vmatpush.msra.mxu0 %v94
    %100 = vmatpush.msra.mxu0 %v93
    %101 = vmatpush.msra.mxu0 %v92
    %102 = vmatpush.msra.mxu0 %v91
    %103 = vmatpush.msra.mxu0 %v90
    %104 = vmatpush.msra.mxu0 %v89
    %105 = vmatpush.msra.mxu0 %v88
    %106 = vmatpush.msra.mxu0 %v87
    %107 = vmatpush.msra.mxu0 %v86
    %108 = vmatpush.msra.mxu0 %v85
    %109 = vmatpush.msra.mxu0 %v84
    %110 = vmatpush.msra.mxu0 %v83
    %111 = vmatpush.msra.mxu0 %v82
    %112 = vmatpush.msra.mxu0 %v81
    %113 = vmatmul.f32.gmra.mxu0 %v80
    %v114 = vpop.f32.mrf.mxu0
    %v115 = vadd.f32 0.0, %v114
    %116 = vdwg.mxu0
    %v117 = vlaneseq
    %v118 = vand.u32 %v117, 127
    %vm119 = vcmp.lt.s32.totalorder %v118, 5
    %vm120 = vcmp.ge.s32.totalorder %v118, 50
    %s121 = sld [smem:[#allocation3]]
    %v122 = vstv %s121
    %vm123 = vcmp.lt.f32.partialorder %v115, %v122
    %vm124 = vmor %vm123, %vm119
    %v125 = vsel %vm124, %v55, -1000.0
    %v126 = vsel %vm120, -1e+09, %v125
    %v127 = vsel %vm56, %v126, -inf
    %128 = vmax.xlane.f32.xlu0 %v127
    %v129 = vpop.xlane.xlu0 %128
    %v130 = vsub.f32 %v126, %v129
    %v131 = vmul.f32 %v130, 1.442695
    %v132 = vpow.pop %v131
    %v133 = vsel %vm56, %v132, 0.0
    %134 = vadd.xlane.f32.xlu0 %v133
    %v135 = vpop.xlane.xlu0 %134
    %v136 = vrcp.pop %v135
    %v137 = vmul.f32 %v132, %v136
    %138 = vst [vmem:[#allocation7] sm:$0x1] %v137
    // Predicated region
    $region22: #{lm_head_forward.3} parent=1 // pred_check
      _
    $region23: #{lm_head_forward.3} parent=1 // pred_check_branch
      %140 = sbr.rel (0) target = $region25
    $region24: #{lm_head_forward.3} parent=1 // pred_region
      %142 = vsyncadd [#allocation6], 0
      %s144 = sshll.u32 [#allocation7], 4
      %s145 = int_to_ptr.vmem [resolvable:$true] %s144
      %s146 = sshll.u32 %s4, 4
      %s147 = int_to_ptr.hbm [resolvable:$true] %s146
      %149 = dma.vmem_to_hbm [thread:$0]  %s145, 16, %s147, [#allocation6]
    $region25: #{lm_head_forward.3} parent=1 // pred_fallthru
      _
    // Predicated region
    $region26: #{lm_head_forward.3} parent=1 // pred_check
      _
    $region27: #{lm_head_forward.3} parent=1 // pred_check_branch
      %151 = sbr.rel (0) target = $region29
    $region28: #{lm_head_forward.3} parent=1 // pred_region
      %153 = dma.done [#allocation6], 16
    $region29: #{lm_head_forward.3} parent=1 // pred_fallthru
      _
    %154 = vsyncpa [#allocation5], 1
    %155 = vsyncpa [#allocation6], 1

// kernel: lm_head_forward.2
$region0: #{lm_head_forward.2}
  #allocation0 [shape = 'u32[]', space=smem, size = 0x4, offset = 0x4, fixed_abs, tag = 'smem constant byte address 0x4 - core index']
  #allocation1 [shape = 'u32[72,128]{1,0:T(1,128)}', space=vmem, size = 0x9000, scoped, tag = 'internal scratch']
  #allocation2 [shape = 'f32[1,1]{1,0:T(1,128)S(6)}', space=smem, size = 0x200, scoped, tag = 'scoped memory for lm_head_forward.2']
  %s0 = inlined_call_operand.vmem [shape: s32[1,8], index: 0, kind: input, shape index: {}]
  %s1 = inlined_call_operand.<no memory space> [shape: f32[1,1], index: 1, kind: input, shape index: {}]
  %s2 = inlined_call_operand.vmem [shape: f32[1,32], index: 2, kind: input, shape index: {}]
  %s3 = inlined_call_operand.vmem [shape: f32[1,32], index: 3, kind: input, shape index: {}]
  %s4 = inlined_call_operand.hbm [shape: bf16[32,256], index: 4, kind: input, shape index: {}]
  %s5 = inlined_call_operand.vmem [shape: f32[1,256], index: 5, kind: output, shape index: {}]
  %s6 = sld [smem:[#allocation0]]
  $region61: #{lm_head_forward.2} parent=0
    _
  %s8 = ssub.s32 1, %s6
  %s9 = scalar_select 0, %s8, %s6
  %10 = sst [smem:[#allocation2]] %s1
  $region1: #{lm_head_forward.2} parent=0
    #allocation3 [shape = 'u8[512]{0}', space=smem, size = 0x200, scoped, tag = 'input window, operand 0, single buffered']
    #allocation4 [shape = 's32[2]{0}', space=sflag, size = 0x8, scoped, tag = 'scoped memory for lm_head_forward.2']
    #allocation5 [shape = 's32[2]{0}', space=sflag, size = 0x8, scoped, tag = 'scoped memory for lm_head_forward.2']
    #allocation6 [shape = 'u8[16384]{0}', space=vmem, size = 0x4000, scoped, tag = 'input window, operand 4']
    %11 = vsyncpa [#allocation5], 0
    %12 = vsyncpa [#allocation4], 0
    %s13 = scalar_lea.sflag [#allocation4], 1
    %14 = vsyncpa %s13, 0
    loop: start=0, step=1, limit=4
    $region2: #{lm_head_forward.2} parent=1 // loop_pre_header
      _
    $region3: #{lm_head_forward.2} parent=1 // loop_header
      %s16 = sphi 0, %s20
      %p17 = scmp.ge.s32.totalorder %s16, 4
      %s24 = sphi 0, %s24
      %s26 = sphi 0, %s24
      %s27 = sphi 0, %s26
      %s41 = sphi 0, %s27
      %s45 = sphi 0, %s45
      %s47 = sphi 0, %s45
      %s48 = sphi 0, %s47
      %s62 = sphi 0, %s48
      %s66 = sphi 0, %s66
      %s68 = sphi 0, %s66
      %s69 = sphi 0, %s68
      %s83 = sphi 0, %s69
      %s87 = sphi 0, %s87
      %s89 = sphi 0, %s87
      %s90 = sphi 0, %s89
      %s104 = sphi 0, %s90
      %s110 = sphi 0, %s112
      %s113 = sphi 0, %s110
      %s114 = sphi 0, %s113
      %s130 = sphi 0, %s114
      %s136 = sphi 0, %s138
      %s139 = sphi 0, %s136
      %s140 = sphi 0, %s139
      %s156 = sphi 0, %s140
    $region4: #{lm_head_forward.2} parent=1 // loop_header_branch
      %19 = sbr.rel (%p17) target = $region8
    $region5: #{lm_head_forward.2} parent=1 // loop_body
      %s21 = ssub.s32 %s16, 1
      %s22 = ssub.s32 %s16, 2
      %s23 = sadd.s32 %s16, 1
      %s25 = sadd.s32 %s24, 1
      %p28 = scmp.eq.s32.totalorder %s16, 1
      %p29 = scmp.ne.s32.totalorder %s24, %s26
      %p30 = scmp.eq.s32.totalorder %s16, 0
      %p31 = por %p29, %p30
      %p32 = scmp.ne.s32.totalorder %s24, %s26
      %p33 = scmp.eq.s32.totalorder %s21, 1
      %p34 = por %p32, %p33
      %p35 = scmp.ne.s32.totalorder %s26, %s27
      %p36 = scmp.eq.s32.totalorder %s21, 0
      %p37 = por %p35, %p36
      %p38 = scmp.ne.s32.totalorder %s26, %s27
      %p39 = scmp.eq.s32.totalorder %s22, 1
      %p40 = por %p38, %p39
      %p42 = scmp.ne.s32.totalorder %s27, %s41
      %p43 = scmp.eq.s32.totalorder %s22, 0
      %p44 = por %p42, %p43
      %s46 = sadd.s32 %s45, 1
      %p49 = scmp.eq.s32.totalorder %s16, 1
      %p50 = scmp.ne.s32.totalorder %s45, %s47
      %p51 = scmp.eq.s32.totalorder %s16, 0
      %p52 = por %p50, %p51
      %p53 = scmp.ne.s32.totalorder %s45, %s47
      %p54 = scmp.eq.s32.totalorder %s21, 1
      %p55 = por %p53, %p54
      %p56 = scmp.ne.s32.totalorder %s47, %s48
      %p57 = scmp.eq.s32.totalorder %s21, 0
      %p58 = por %p56, %p57
      %p59 = scmp.ne.s32.totalorder %s47, %s48
      %p60 = scmp.eq.s32.totalorder %s22, 1
      %p61 = por %p59, %p60
      %p63 = scmp.ne.s32.totalorder %s48, %s62
      %p64 = scmp.eq.s32.totalorder %s22, 0
      %p65 = por %p63, %p64
      %s67 = sadd.s32 %s66, 1
      %p70 = scmp.eq.s32.totalorder %s16, 1
      %p71 = scmp.ne.s32.totalorder %s66, %s68
      %p72 = scmp.eq.s32.totalorder %s16, 0
      %p73 = por %p71, %p72
      %p74 = scmp.ne.s32.totalorder %s66, %s68
      %p75 = scmp.eq.s32.totalorder %s21, 1
      %p76 = por %p74, %p75
      %p77 = scmp.ne.s32.totalorder %s68, %s69
      %p78 = scmp.eq.s32.totalorder %s21, 0
      %p79 = por %p77, %p78
      %p80 = scmp.ne.s32.totalorder %s68, %s69
      %p81 = scmp.eq.s32.totalorder %s22, 1
      %p82 = por %p80, %p81
      %p84 = scmp.ne.s32.totalorder %s69, %s83
      %p85 = scmp.eq.s32.totalorder %s22, 0
      %p86 = por %p84, %p85
      %s88 = sadd.s32 %s87, 1
      %p91 = scmp.eq.s32.totalorder %s16, 1
      %p92 = scmp.ne.s32.totalorder %s87, %s89
      %p93 = scmp.eq.s32.totalorder %s16, 0
      %p94 = por %p92, %p93
      %p95 = scmp.ne.s32.totalorder %s87, %s89
      %p96 = scmp.eq.s32.totalorder %s21, 1
      %p97 = por %p95, %p96
      %p98 = scmp.ne.s32.totalorder %s89, %s90
      %p99 = scmp.eq.s32.totalorder %s21, 0
      %p100 = por %p98, %p99
      %p101 = scmp.ne.s32.totalorder %s89, %s90
      %p102 = scmp.eq.s32.totalorder %s22, 1
      %p103 = por %p101, %p102
      %p105 = scmp.ne.s32.totalorder %s90, %s104
      %p106 = scmp.eq.s32.totalorder %s22, 0
      %p107 = por %p105, %p106
      %s108 = ssub.s32 %s16, %s23
      %p109 = scmp.eq.s32.totalorder %s108, 0
      %s111 = sadd.s32 %s110, 1
      %s112 = scalar_select %p109, %s110, %s111
      %p115 = pneg %p109
      %p116 = scmp.eq.s32.totalorder %s16, 1
      %p117 = por %p115, %p116
      %p118 = scmp.ne.s32.totalorder %s110, %s113
      %p119 = scmp.eq.s32.totalorder %s16, 0
      %p120 = por %p118, %p119
      %p121 = scmp.ne.s32.totalorder %s110, %s113
      %p122 = scmp.eq.s32.totalorder %s21, 1
      %p123 = por %p121, %p122
      %p124 = scmp.ne.s32.totalorder %s113, %s114
      %p125 = scmp.eq.s32.totalorder %s21, 0
      %p126 = por %p124, %p125
      %p127 = scmp.ne.s32.totalorder %s113, %s114
      %p128 = scmp.eq.s32.totalorder %s22, 1
      %p129 = por %p127, %p128
      %p131 = scmp.ne.s32.totalorder %s114, %s130
      %p132 = scmp.eq.s32.totalorder %s22, 0
      %p133 = por %p131, %p132
      %s134 = ssub.s32 %s16, %s23
      %p135 = scmp.eq.s32.totalorder %s134, 0
      %s137 = sadd.s32 %s136, 1
      %s138 = scalar_select %p135, %s136, %s137
      %p141 = pneg %p135
      %p142 = scmp.eq.s32.totalorder %s16, 1
      %p143 = por %p141, %p142
      %p144 = scmp.ne.s32.totalorder %s136, %s139
      %p145 = scmp.eq.s32.totalorder %s16, 0
      %p146 = por %p144, %p145
      %p147 = scmp.ne.s32.totalorder %s136, %s139
      %p148 = scmp.eq.s32.totalorder %s21, 1
      %p149 = por %p147, %p148
      %p150 = scmp.ne.s32.totalorder %s139, %s140
      %p151 = scmp.eq.s32.totalorder %s21, 0
      %p152 = por %p150, %p151
      %p153 = scmp.ne.s32.totalorder %s139, %s140
      %p154 = scmp.eq.s32.totalorder %s22, 1
      %p155 = por %p153, %p154
      %p157 = scmp.ne.s32.totalorder %s140, %s156
      %p158 = scmp.eq.s32.totalorder %s22, 0
      %p159 = por %p157, %p158
      %p160 = scmp.le.s32.totalorder 1, %s16
      %p161 = scmp.lt.s32.totalorder %s16, 3
      %p162 = pnand %p160, %p161
      %p163 = pneg %p162
      // Predicated region
      $region9: #{lm_head_forward.2} parent=5 // pred_check
        _
      $region10: #{lm_head_forward.2} parent=5 // pred_check_branch
        %165 = sbr.rel (%p162) target = $region12
      $region11: #{lm_head_forward.2} parent=5 // pred_region
        %s166 = ssub.s32 %s16, 1
        // Predicated region
        $region13: #{lm_head_forward.2} parent=11 // pred_check
          %p167 = pneg %p37
        $region14: #{lm_head_forward.2} parent=11 // pred_check_branch
          %169 = sbr.rel (%p167) target = $region16
        $region15: #{lm_head_forward.2} parent=11 // pred_region
          %171 = vsyncadd [#allocation5], 0
          %s173 = sshll.u32 %s0, 4
          %s174 = int_to_ptr.vmem [resolvable:$true] %s173
          %176 = dma.vmem_to_smem %s174, 16, [#allocation3], [#allocation5]
        $region16: #{lm_head_forward.2} parent=11 // pred_fallthru
          _
        // Predicated region
        $region17: #{lm_head_forward.2} parent=11 // pred_check
          %p177 = pneg %p58
        $region18: #{lm_head_forward.2} parent=11 // pred_check_branch
          %179 = sbr.rel (%p177) target = $region20
        $region19: #{lm_head_forward.2} parent=11 // pred_region
          _
        $region20: #{lm_head_forward.2} parent=11 // pred_fallthru
          _
        // Predicated region
        $region21: #{lm_head_forward.2} parent=11 // pred_check
          %p180 = pneg %p79
        $region22: #{lm_head_forward.2} parent=11 // pred_check_branch
          %182 = sbr.rel (%p180) target = $region24
        $region23: #{lm_head_forward.2} parent=11 // pred_region
          _
        $region24: #{lm_head_forward.2} parent=11 // pred_fallthru
          _
        // Predicated region
        $region25: #{lm_head_forward.2} parent=11 // pred_check
          %p183 = pneg %p100
        $region26: #{lm_head_forward.2} parent=11 // pred_check_branch
          %185 = sbr.rel (%p183) target = $region28
        $region27: #{lm_head_forward.2} parent=11 // pred_region
          _
        $region28: #{lm_head_forward.2} parent=11 // pred_fallthru
          _
      $region12: #{lm_head_forward.2} parent=5 // pred_fallthru
        _
      %p186 = scmp.lt.s32.totalorder %s16, 2
      // Predicated region
      $region29: #{lm_head_forward.2} parent=5 // pred_check
        %p187 = pneg %p186
      $region30: #{lm_head_forward.2} parent=5 // pred_check_branch
        %189 = sbr.rel (%p187) target = $region32
      $region31: #{lm_head_forward.2} parent=5 // pred_region
        // Predicated region
        $region33: #{lm_head_forward.2} parent=31 // pred_check
          %p190 = pneg %p120
        $region34: #{lm_head_forward.2} parent=31 // pred_check_branch
          %192 = sbr.rel (%p190) target = $region36
        $region35: #{lm_head_forward.2} parent=31 // pred_region
          %s193 = sand.u32 %s110, 1
          %s194 = scalar_lea.sflag [#allocation4], %s193
          %s195 = sand.u32 %s110, 1
          %s196 = smul.addr %s195, 16
          %s197 = scalar_lea.vmem [#allocation6], %s196
          %199 = vsyncadd %s194, 0
          %s200 = smul.addr %s16, 4
          %s201 = scalar_lea.hbm %s4, %s200
          %s202 = sshll.u32 %s201, 4
          %s203 = int_to_ptr.hbm [resolvable:$true] %s202
          %s204 = sshll.u32 %s197, 4
          %s205 = int_to_ptr.vmem [resolvable:$true] %s204
          %210 = dma.hbm_to_vmem [thread:$0]  %s203, 256, %s205, %s194, 128, 64, 4
        $region36: #{lm_head_forward.2} parent=31 // pred_fallthru
          _
      $region32: #{lm_head_forward.2} parent=5 // pred_fallthru
        _
      %p211 = scmp.le.s32.totalorder 1, %s16
      %p212 = scmp.lt.s32.totalorder %s16, 3
      %p213 = pnand %p211, %p212
      %p214 = pneg %p213
      // Predicated region
      $region37: #{lm_head_forward.2} parent=5 // pred_check
        _
      $region38: #{lm_head_forward.2} parent=5 // pred_check_branch
        %216 = sbr.rel (%p213) target = $region40
      $region39: #{lm_head_forward.2} parent=5 // pred_region
        %s217 = ssub.s32 %s16, 1
        // Predicated region
        $region41: #{lm_head_forward.2} parent=39 // pred_check
          %p218 = pneg %p37
        $region42: #{lm_head_forward.2} parent=39 // pred_check_branch
          %220 = sbr.rel (%p218) target = $region44
        $region43: #{lm_head_forward.2} parent=39 // pred_region
          %222 = dma.done [#allocation5], 16
        $region44: #{lm_head_forward.2} parent=39 // pred_fallthru
          _
        %s223 = sand.u32 %s113, 1
        %s224 = scalar_lea.sflag [#allocation4], %s223
        %s225 = sand.u32 %s113, 1
        %s226 = smul.addr %s225, 16
        %s227 = scalar_lea.vmem [#allocation6], %s226
        // Predicated region
        $region45: #{lm_head_forward.2} parent=39 // pred_check
          %p228 = pneg %p126
        $region46: #{lm_head_forward.2} parent=39 // pred_check_branch
          %230 = sbr.rel (%p228) target = $region48
        $region47: #{lm_head_forward.2} parent=39 // pred_region
          %232 = dma.done %s224, 256
        $region48: #{lm_head_forward.2} parent=39 // pred_fallthru
          _
        %233 = sfence
        %p234 = pneg %p37
        %p235 = pneg %p34
        %p236 = pneg %p58
        %p237 = pneg %p55
        %p238 = pneg %p79
        %p239 = pneg %p76
        %p240 = pneg %p100
        %p241 = pneg %p97
        %s242 = sand.u32 %s113, 1
        %s243 = scalar_lea.sflag [#allocation4], %s242
        %s244 = sand.u32 %s113, 1
        %s245 = smul.addr %s244, 16
        %s246 = scalar_lea.vmem [#allocation6], %s245
        %p247 = pneg %p126
        %p248 = pneg %p123
        %p249 = pneg %p152
        %p250 = pneg %p149
        %p251 = scmp.lt.s32.totalorder %s21, 1
        %s252 = scalar_select %p251, %s21, 1
        %s253 = scalar_lea.vmem %s5, %s252
        %p254 = scmp.lt.s32.totalorder %s21, 1
        %s255 = scalar_select %p254, %s21, 1
        %s256 = scalar_lea.vmem %s5, %s255
        %v258 = vld [vmem:[%s2] sm:$0x1]
        %v259 = vmul.f32 %v258, %v258
        %vm260 = vcmask 253952
        %v261 = vsel %vm260, %v259, 0.0
        %262 = vadd.xlane.f32.xlu0 %v261
        %v263 = vpop.xlane.xlu0 %262
        %v264 = vrcp.pop 32.0
        %v265 = vmul.f32 32.0, %v264
        %v266 = vsub.f32 1.0, %v265
        %v267 = vmul.f32 %v264, %v266
        %v268 = vadd.f32 %v264, %v267
        %vm269 = vweird.f32 %v264
        %v270 = vsel %vm269, %v264, %v268
        %v271 = vmul.f32 %v263, %v270
        %v272 = vadd.f32 %v271, 1e-06
        %v273 = vrsqrt.pop %v272
        %v274 = vmul.f32 %v273, %v272
        %v275 = vmul.f32 %v274, %v273
        %v276 = vmul.f32 0.5, %v275
        %v277 = vsub.f32 1.5, %v276
        %v278 = vmul.f32 %v273, %v277
        %vm279 = vweird.f32 %v272
        %vm280 = vweird.f32 %v273
        %vm281 = vmor %vm279, %vm280
        %v282 = vsel %vm281, %v273, %v278
        %v283 = vmul.f32 %v258, %v282
        %v284 = vld [vmem:[%s3] sm:$0x1]
        %v285 = vmul.f32 %v283, %v284
        %v286 = vpack.c.bf16 %v285, %v285
        %v287 = vld [vmem:[%s227] sm:$0xf]
        %v288 = vld [vmem:[%s227 + $0x4] sm:$0xf]
        %v289 = vld [vmem:[%s227 + $0x8] sm:$0xf]
        %v290 = vld [vmem:[%s227 + $0xc] sm:$0xf]
        %v295 = vunpack.c.l.b16 %v287
        %v296 = vunpack.c.l.b16 %v288
        %v297 = vunpack.c.l.b16 %v289
        %v298 = vunpack.c.l.b16 %v290
        %v299 = vpack.c.b16 %v296, %v295
        %v300 = vpack.c.b16 %v298, %v297
        %vm303 = vcmask 261120
        %v305 = vsel %vm303, %v286, 0
        %307 = vmatpush.bf16.msra.mxu0 0
        %308 = vmatpush.bf16.msra.mxu0 0
        %309 = vmatpush.bf16.msra.mxu0 0
        %310 = vmatpush.bf16.msra.mxu0 0
        %311 = vmatpush.bf16.msra.mxu0 0
        %312 = vmatpush.bf16.msra.mxu0 0
        %313 = vmatpush.bf16.msra.mxu0 %v300
        %314 = vmatpush.bf16.msra.mxu0 %v299
        %315 = vmatmul.bf16.gmra.mxu0 %v305
        %v316 = vpop.f32.mrf.mxu0
        %v317 = vadd.f32 0.0, %v316
        %v318 = vpop.f32.mrf.mxu0
        %319 = vdwg.mxu0
        %s320 = smul.u32 %s21, 128
        %v321 = vlaneseq
        %v322 = vand.u32 %v321, 127
        %v323 = vstv %s320
        %v324 = vadd.s32 %v323, %v322
        %s325 = sld [smem:[#allocation3]]
        %v326 = vstv %s325
        %vm327 = vcmp.eq.s32.totalorder %v324, %v326
        %s328 = sld [smem:[#allocation3 + $0x1]]
        %v329 = vstv %s328
        %vm330 = vcmp.eq.s32.totalorder %v324, %v329
        %vm331 = vmor %vm327, %vm330
        %s332 = sld [smem:[#allocation3 + $0x2]]
        %v333 = vstv %s332
        %vm334 = vcmp.eq.s32.totalorder %v324, %v333
        %vm335 = vmor %vm331, %vm334
        %s336 = sld [smem:[#allocation3 + $0x3]]
        %v337 = vstv %s336
        %vm338 = vcmp.eq.s32.totalorder %v324, %v337
        %vm339 = vmor %vm335, %vm338
        %s340 = sld [smem:[#allocation3 + $0x4]]
        %v341 = vstv %s340
        %vm342 = vcmp.eq.s32.totalorder %v324, %v341
        %vm343 = vmor %vm339, %vm342
        %s344 = sld [smem:[#allocation3 + $0x5]]
        %v345 = vstv %s344
        %vm346 = vcmp.eq.s32.totalorder %v324, %v345
        %vm347 = vmor %vm343, %vm346
        %s348 = sld [smem:[#allocation3 + $0x6]]
        %v349 = vstv %s348
        %vm350 = vcmp.eq.s32.totalorder %v324, %v349
        %vm351 = vmor %vm347, %vm350
        %s352 = sld [smem:[#allocation3 + $0x7]]
        %v353 = vstv %s352
        %vm354 = vcmp.eq.s32.totalorder %v324, %v353
        %vm355 = vmor %vm351, %vm354
        %s356 = sld [smem:[#allocation2]]
        %v357 = vstv %s356
        %v358 = vrcp.pop %v357
        %v359 = vmul.f32 %v357, %v358
        %v360 = vsub.f32 1.0, %v359
        %v361 = vmul.f32 %v358, %v360
        %v362 = vadd.f32 %v358, %v361
        %vm363 = vweird.f32 %v357
        %vm364 = vweird.f32 %v358
        %vm365 = vmor %vm363, %vm364
        %v366 = vsel %vm365, %v358, %v362
        %v367 = vand.u32 2147483647, %v357
        %vm368 = vcmp.eq.f32.partialorder %v367, 8.507059e+37
        %v369 = vand.u32 %v357, 2147483648
        %v370 = vor.u32 1.1754944e-38, %v369
        %v371 = vsel %vm368, %v370, %v366
        %s372 = vtos %v371
        %vm373 = vcmp.lt.f32.partialorder %v317, 0.0
        %v374 = vstv %s356
        %v375 = vmul.f32 %v317, %v374
        %v376 = vstv %s372
        %v377 = vmul.f32 %v317, %v376
        %v378 = vsel %vm373, %v375, %v377
        %v379 = vsel %vm355, %v378, %v317
        %380 = vst [vmem:[%s256] sm:$0x1] %v379
        %p381 = scmp.lt.s32.totalorder %s21, 1
        %s382 = scalar_select %p381, %s21, 1
        %s383 = scalar_lea.vmem %s5, %s382
        // Predicated region
        $region49: #{lm_head_forward.2} parent=39 // pred_check
          %p384 = pneg %p149
        $region50: #{lm_head_forward.2} parent=39 // pred_check_branch
          %386 = sbr.rel (%p384) target = $region52
        $region51: #{lm_head_forward.2} parent=39 // pred_region
          _
        $region52: #{lm_head_forward.2} parent=39 // pred_fallthru
          _
      $region40: #{lm_head_forward.2} parent=5 // pred_fallthru
        _
      %p387 = scmp.le.s32.totalorder 2, %s16
      // Predicated region
      $region53: #{lm_head_forward.2} parent=5 // pred_check
        %p388 = pneg %p387
      $region54: #{lm_head_forward.2} parent=5 // pred_check_branch
        %390 = sbr.rel (%p388) target = $region56
      $region55: #{lm_head_forward.2} parent=5 // pred_region
        %s391 = ssub.s32 %s16, 2
        // Predicated region
        $region57: #{lm_head_forward.2} parent=55 // pred_check
          %p392 = pneg %p155
        $region58: #{lm_head_forward.2} parent=55 // pred_check_branch
          %394 = sbr.rel (%p392) target = $region60
        $region59: #{lm_head_forward.2} parent=55 // pred_region
          %p395 = scmp.lt.s32.totalorder %s22, 1
          %s396 = scalar_select %p395, %s22, 1
          %s397 = scalar_lea.vmem %s5, %s396
        $region60: #{lm_head_forward.2} parent=55 // pred_fallthru
          _
      $region56: #{lm_head_forward.2} parent=5 // pred_fallthru
        _
    $region6: #{lm_head_forward.2} parent=1 // loop_footer
      %s20 = sadd.s32 1, %s16
    $region7: #{lm_head_forward.2} parent=1 // loop_footer_branch
      %15 = sbr.rel target = $region3
    $region8: #{lm_head_forward.2} parent=1 // loop_exit
      _
    %398 = vsyncpa [#allocation4], 1
    %s399 = scalar_lea.sflag [#allocation4], 1
    %400 = vsyncpa %s399, 1
    %401 = vsyncpa [#allocation5], 1
    %s402 = scalar_lea.sflag [#allocation5], 1
    %403 = vsyncpa %s402, 1

</llo_original>
